<compile_context>
chip_gen: v7x
topology: tpu7x:2x2x1
jax: 0.10.0
libtpu: 0.0.40
codegen_flags: <defaults>
</compile_context>

<pallas_src>
import functools

import jax
import jax.numpy as jnp
from jax.experimental import pallas as pl
from jax.experimental.pallas import tpu as pltpu

IN_DIM = 14
HID_DIM = 7
OUT_DIM = 1

P = 36               # batch rows packed per packed-row (block-diag replication)
TILE_G_MAX = 1024    # packed rows per grid step  (= 36864 batch rows)


def _round_up(n, m):
    return ((n + m - 1) // m) * m


def feedforward_kernel(x_ref, w1_ref, b1_ref, w2_ref, b2_ref, o_ref):
    # x_ref : [tile_g, P*14]   packed batch tile (lane-dense)
    # w1_ref: [P*14, P*7]      block-diag of W1^T          (VMEM-resident)
    # b1_ref: [1, P*7]         b1 tiled P times            (VMEM-resident)
    # w2_ref: [P*7, P]         block-diag of fc3.weight^T  (VMEM-resident)
    # b2_ref: [1, P]           b2 broadcast                (VMEM-resident)
    # o_ref : [tile_g, P]      packed output tile
    x = x_ref[...]

    # Layer 1: native NN matmul on the MXU (2 weight sub-tiles, no transpose).
    h = jnp.dot(x, w1_ref[...], preferred_element_type=jnp.float32)
    h = jnp.maximum(h + b1_ref[...], 0.0)                 # bias + ReLU (VPU)

    # Layer 2: native NN matmul (single weight sub-tile) + bias.
    out = jnp.dot(h, w2_ref[...], preferred_element_type=jnp.float32)
    o_ref[...] = (out + b2_ref[...]).astype(o_ref.dtype)


@functools.partial(jax.jit, static_argnames=("tile_g_max",))
def feedforward(x, w1, b1, w2, b2, *, tile_g_max=TILE_G_MAX):
    """x: [B, 14] f32.  Weights in PyTorch layout:
       w1: [7, 14], b1: [7], w2: [1, 7], b2: [1].  Returns [B, 1] f32."""
    B = x.shape[0]
    x = jnp.asarray(x, jnp.float32)
    w1f = jnp.asarray(w1, jnp.float32).reshape(HID_DIM, IN_DIM)
    b1f = jnp.asarray(b1, jnp.float32).reshape(HID_DIM)
    w2f = jnp.asarray(w2, jnp.float32).reshape(OUT_DIM, HID_DIM)
    b2f = jnp.asarray(b2, jnp.float32).reshape(())

    # ---- block-diagonal replicated weights (tiny; built once per call) ----
    eye_p = jnp.eye(P, dtype=jnp.float32)
    # W1_blk[i*14+k, i*7+j] = W1[j, k]   -> [504, 252]
    w1_blk = jnp.einsum("pq,kh->pkqh", eye_p, w1f.T).reshape(P * IN_DIM, P * HID_DIM)
    # W2_blk[i*7+j, i] = w2[0, j]        -> [252, 36]
    w2_blk = jnp.einsum("pq,j->pjq", eye_p, w2f[0]).reshape(P * HID_DIM, P)
    b1_row = jnp.tile(b1f[None, :], (1, P))               # [1, 252]
    b2_row = jnp.broadcast_to(b2f.reshape(1, 1), (1, P))  # [1, 36]

    # ---- pack the batch: [B,14] -> [G, P*14] (pad ONLY if B % P != 0) ----
    G = pl.cdiv(B, P)
    B_pad = G * P
    if B_pad != B:
        # At most P-1 rows appended; padded rows never mix with valid rows and
        # their outputs are sliced off below.
        x = jnp.pad(x, ((0, B_pad - B), (0, 0)))
    xp = x.reshape(G, P * IN_DIM)

    # ---- tile the packed-batch axis ----
    if G > tile_g_max:
        tile_g = tile_g_max
    elif G >= 64:
        # >= 2 grid steps so ("parallel",) can shard over v7x's 2 TensorCores.
        tile_g = _round_up(pl.cdiv(G, 2), 8)
    else:
        tile_g = G                       # single full-extent block
    num_tiles = pl.cdiv(G, tile_g)

    out = pl.pallas_call(
        feedforward_kernel,
        out_shape=jax.ShapeDtypeStruct((G, P), jnp.float32),
        grid_spec=pltpu.PrefetchScalarGridSpec(
            num_scalar_prefetch=0,
            grid=(num_tiles,),
            in_specs=[
                # packed activations: tiled, double-buffered by Pallas
                pl.BlockSpec((tile_g, P * IN_DIM), lambda i: (i, 0)),
                # parameters: constant index maps -> VMEM-resident across steps
                pl.BlockSpec((P * IN_DIM, P * HID_DIM), lambda i: (0, 0)),
                pl.BlockSpec((1, P * HID_DIM), lambda i: (0, 0)),
                pl.BlockSpec((P * HID_DIM, P), lambda i: (0, 0)),
                pl.BlockSpec((1, P), lambda i: (0, 0)),
            ],
            out_specs=pl.BlockSpec((tile_g, P), lambda i: (i, 0)),
        ),
        compiler_params=pltpu.CompilerParams(
            dimension_semantics=("parallel",),     # megacore on v7x
            vmem_limit_bytes=48 * 1024 * 1024,
        ),
    )(xp, w1_blk, b1_row, w2_blk, b2_row)

    # Unpack: out[g, i] = y[g*P + i]; drop padded tail rows.
    return out.reshape(-1, 1)[:B]


def _init_params(key):
    """Deterministic init mimicking torch.nn.Linear default U(-1/sqrt(fan_in), +)."""
    k1, k2, k3, k4 = jax.random.split(key, 4)
    bound1 = 1.0 / jnp.sqrt(IN_DIM)
    bound2 = 1.0 / jnp.sqrt(HID_DIM)
    w1 = jax.random.uniform(k1, (HID_DIM, IN_DIM), jnp.float32, -bound1, bound1)
    b1 = jax.random.uniform(k2, (HID_DIM,), jnp.float32, -bound1, bound1)
    w2 = jax.random.uniform(k3, (OUT_DIM, HID_DIM), jnp.float32, -bound2, bound2)
    b2 = jax.random.uniform(k4, (OUT_DIM,), jnp.float32, -bound2, bound2)
    return w1, b1, w2, b2


if __name__ == "__main__":
    key = jax.random.PRNGKey(0)
    k_x, k_p = jax.random.split(key)

    B = 200  # deliberately ragged w.r.t. P=36: exercises pad + tail-slice path
    x = jax.random.normal(k_x, (B, IN_DIM), jnp.float32)
    w1, b1, w2, b2 = _init_params(k_p)

    out = feedforward(x, w1, b1, w2, b2)
    out = jax.block_until_ready(out)

    # Pure-JAX reference (forward does NOT apply sigmoid, matching the module).
    ref = jnp.maximum(x @ w1.T + b1, 0.0) @ w2.T + b2
    assert out.shape == (B, OUT_DIM)
    assert jnp.allclose(out, ref, atol=1e-4, rtol=1e-4), "mismatch vs reference"

    print("KERNEL_OK")
</pallas_src>

<mosaic_0001>
module attributes {stable_mosaic.version = 11 : i64} {
  func.func @feedforward_kernel(%arg0: i32, %arg1: memref<6x504xf32, #tpu.memory_space<vmem>>, %arg2: memref<504x252xf32, #tpu.memory_space<vmem>>, %arg3: memref<1x252xf32, #tpu.memory_space<vmem>>, %arg4: memref<252x36xf32, #tpu.memory_space<vmem>>, %arg5: memref<1x36xf32, #tpu.memory_space<vmem>>, %arg6: memref<6x36xf32, #tpu.memory_space<vmem>>) attributes {dimension_semantics = [#tpu.dimension_semantics<parallel>], iteration_bounds = array<i64: 1>, scalar_prefetch = 0 : i64, scratch_operands = 0 : i64, tpu.core_type = #tpu.core_type<tc>, window_params = [{transform_indices = @transform_0, window_bounds = array<i64: 6, 504>}, {pipeline_mode = #tpu.pipeline_mode<synchronous>, transform_indices = @transform_1, window_bounds = array<i64: 504, 252>}, {pipeline_mode = #tpu.pipeline_mode<synchronous>, transform_indices = @transform_2, window_bounds = array<i64: 1, 252>}, {pipeline_mode = #tpu.pipeline_mode<synchronous>, transform_indices = @transform_3, window_bounds = array<i64: 252, 36>}, {pipeline_mode = #tpu.pipeline_mode<synchronous>, transform_indices = @transform_4, window_bounds = array<i64: 1, 36>}, {transform_indices = @transform_5, window_bounds = array<i64: 6, 36>}]} {
    %c0 = arith.constant 0 : index
    %c0_0 = arith.constant 0 : index
    %0 = vector.load %arg1[%c0, %c0_0] : memref<6x504xf32, #tpu.memory_space<vmem>>, vector<6x504xf32>
    %c0_1 = arith.constant 0 : index
    %c0_2 = arith.constant 0 : index
    %1 = vector.load %arg2[%c0_1, %c0_2] : memref<504x252xf32, #tpu.memory_space<vmem>>, vector<504x252xf32>
    %cst = arith.constant dense<0.000000e+00> : vector<6x252xf32>
    %2 = tpu.matmul %0, %1, %cst {dimension_numbers = #tpu.dot_dimension_numbers<[1], [0], [0], [1], [0, 0, 1, 1], [], []>} : vector<6x504xf32>, vector<504x252xf32>, vector<6x252xf32> -> vector<6x252xf32>
    %c0_3 = arith.constant 0 : index
    %c0_4 = arith.constant 0 : index
    %3 = vector.load %arg3[%c0_3, %c0_4] : memref<1x252xf32, #tpu.memory_space<vmem>>, vector<1x252xf32>
    %4 = vector.broadcast %3 : vector<1x252xf32> to vector<6x252xf32>
    %5 = arith.addf %2, %4 : vector<6x252xf32>
    %cst_5 = arith.constant 0.000000e+00 : f32
    %6 = vector.broadcast %cst_5 : f32 to vector<6x252xf32>
    %7 = arith.maximumf %5, %6 : vector<6x252xf32>
    %c0_6 = arith.constant 0 : index
    %c0_7 = arith.constant 0 : index
    %8 = vector.load %arg4[%c0_6, %c0_7] : memref<252x36xf32, #tpu.memory_space<vmem>>, vector<252x36xf32>
    %cst_8 = arith.constant dense<0.000000e+00> : vector<6x36xf32>
    %9 = tpu.matmul %7, %8, %cst_8 {dimension_numbers = #tpu.dot_dimension_numbers<[1], [0], [0], [1], [0, 0, 1, 1], [], []>} : vector<6x252xf32>, vector<252x36xf32>, vector<6x36xf32> -> vector<6x36xf32>
    %c0_9 = arith.constant 0 : index
    %c0_10 = arith.constant 0 : index
    %10 = vector.load %arg5[%c0_9, %c0_10] : memref<1x36xf32, #tpu.memory_space<vmem>>, vector<1x36xf32>
    %11 = vector.broadcast %10 : vector<1x36xf32> to vector<6x36xf32>
    %12 = arith.addf %9, %11 : vector<6x36xf32>
    %c0_11 = arith.constant 0 : index
    %c0_12 = arith.constant 0 : index
    %13 = vector.load %arg6[%c0_11, %c0_12] : memref<6x36xf32, #tpu.memory_space<vmem>>, vector<6x36xf32>
    tpu.vector_store %arg6[%c0_11, %c0_12], %12 {strides = array<i32>} : memref<6x36xf32, #tpu.memory_space<vmem>>, vector<6x36xf32>,
    return
  }
  func.func @transform_0(%arg0: i32) -> (i32, i32) {
    %c0_i32 = arith.constant 0 : i32
    %c0_i32_0 = arith.constant 0 : i32
    return %arg0, %c0_i32 : i32, i32
  }
  func.func @transform_1(%arg0: i32) -> (i32, i32) {
    %c0_i32 = arith.constant 0 : i32
    %c0_i32_0 = arith.constant 0 : i32
    %c0_i32_1 = arith.constant 0 : i32
    return %c0_i32, %c0_i32_0 : i32, i32
  }
  func.func @transform_2(%arg0: i32) -> (i32, i32) {
    %c0_i32 = arith.constant 0 : i32
    %c0_i32_0 = arith.constant 0 : i32
    %c0_i32_1 = arith.constant 0 : i32
    return %c0_i32, %c0_i32_0 : i32, i32
  }
  func.func @transform_3(%arg0: i32) -> (i32, i32) {
    %c0_i32 = arith.constant 0 : i32
    %c0_i32_0 = arith.constant 0 : i32
    %c0_i32_1 = arith.constant 0 : i32
    return %c0_i32, %c0_i32_0 : i32, i32
  }
  func.func @transform_4(%arg0: i32) -> (i32, i32) {
    %c0_i32 = arith.constant 0 : i32
    %c0_i32_0 = arith.constant 0 : i32
    %c0_i32_1 = arith.constant 0 : i32
    return %c0_i32, %c0_i32_0 : i32, i32
  }
  func.func @transform_5(%arg0: i32) -> (i32, i32) {
    %c0_i32 = arith.constant 0 : i32
    %c0_i32_0 = arith.constant 0 : i32
    return %arg0, %c0_i32 : i32, i32
  }
}

</mosaic_0001>

<llo_original>
// kernel: feedforward.1
$region0: #{feedforward.1}
  #allocation0 [shape = 'u32[]', space=smem, size = 0x4, offset = 0x4, fixed_abs, tag = 'smem constant byte address 0x4 - core index']
  #allocation1 [shape = 'u32[144,128]{1,0:T(1,128)}', space=vmem, size = 0x12000, scoped, tag = 'internal scratch']
  %s0 = inlined_call_operand.vmem [shape: f32[6,504], index: 0, kind: input, shape index: {}]
  %s1 = inlined_call_operand.vmem [shape: f32[504,252], index: 1, kind: input, shape index: {}]
  %s2 = inlined_call_operand.vmem [shape: f32[1,252], index: 2, kind: input, shape index: {}]
  %s3 = inlined_call_operand.vmem [shape: f32[252,36], index: 3, kind: input, shape index: {}]
  %s4 = inlined_call_operand.vmem [shape: f32[1,36], index: 4, kind: input, shape index: {}]
  %s5 = inlined_call_operand.vmem [shape: f32[6,36], index: 5, kind: output, shape index: {}]
  %s6 = sld [smem:[#allocation0]]
  $region30: #{feedforward.1} parent=0
    _
  %s8 = ssub.s32 1, %s6
  %s9 = scalar_select 0, %s8, %s6
  // Predicated region
  $region2: #{feedforward.1} parent=0 // pred_check
    _
  $region3: #{feedforward.1} parent=0 // pred_check_branch
    %11 = sbr.rel (0) target = $region5
  $region4: #{feedforward.1} parent=0 // pred_region
    _
  $region5: #{feedforward.1} parent=0 // pred_fallthru
    _
  // Predicated region
  $region6: #{feedforward.1} parent=0 // pred_check
    _
  $region7: #{feedforward.1} parent=0 // pred_check_branch
    %13 = sbr.rel (0) target = $region9
  $region8: #{feedforward.1} parent=0 // pred_region
    _
  $region9: #{feedforward.1} parent=0 // pred_fallthru
    _
  // Predicated region
  $region10: #{feedforward.1} parent=0 // pred_check
    _
  $region11: #{feedforward.1} parent=0 // pred_check_branch
    %15 = sbr.rel (0) target = $region13
  $region12: #{feedforward.1} parent=0 // pred_region
    _
  $region13: #{feedforward.1} parent=0 // pred_fallthru
    _
  // Predicated region
  $region14: #{feedforward.1} parent=0 // pred_check
    _
  $region15: #{feedforward.1} parent=0 // pred_check_branch
    %17 = sbr.rel (0) target = $region17
  $region16: #{feedforward.1} parent=0 // pred_region
    _
  $region17: #{feedforward.1} parent=0 // pred_fallthru
    _
  // Predicated region
  $region18: #{feedforward.1} parent=0 // pred_check
    _
  $region19: #{feedforward.1} parent=0 // pred_check_branch
    %19 = sbr.rel (0) target = $region21
  $region20: #{feedforward.1} parent=0 // pred_region
    _
  $region21: #{feedforward.1} parent=0 // pred_fallthru
    _
  %v20 = vld [vmem:[%s0] sm:$0x3f]
  %v21 = vld [vmem:[%s0 + $0x8] sm:$0x3f]
  %v22 = vld [vmem:[%s0 + $0x10] sm:$0x3f]
  %v23 = vld [vmem:[%s0 + $0x18] sm:$0x3f]
  %v24 = vld [vmem:[%s1] sm:$0xff]
  %v25 = vld [vmem:[%s1 + $0x8] sm:$0xff]
  %v26 = vld [vmem:[%s1 + $0x10] sm:$0xff]
  %v27 = vld [vmem:[%s1 + $0x18] sm:$0xff]
  %v28 = vld [vmem:[%s1 + $0x20] sm:$0xff]
  %v29 = vld [vmem:[%s1 + $0x28] sm:$0xff]
  %v30 = vld [vmem:[%s1 + $0x30] sm:$0xff]
  %v31 = vld [vmem:[%s1 + $0x38] sm:$0xff]
  %v32 = vld [vmem:[%s1 + $0x40] sm:$0xff]
  %v33 = vld [vmem:[%s1 + $0x48] sm:$0xff]
  %v34 = vld [vmem:[%s1 + $0x50] sm:$0xff]
  %v35 = vld [vmem:[%s1 + $0x58] sm:$0xff]
  %v36 = vld [vmem:[%s1 + $0x60] sm:$0xff]
  %v37 = vld [vmem:[%s1 + $0x68] sm:$0xff]
  %v38 = vld [vmem:[%s1 + $0x70] sm:$0xff]
  %v39 = vld [vmem:[%s1 + $0x78] sm:$0xff]
  %v40 = vld [vmem:[%s1 + $0x80] sm:$0xff]
  %v41 = vld [vmem:[%s1 + $0x88] sm:$0xff]
  %v42 = vld [vmem:[%s1 + $0x90] sm:$0xff]
  %v43 = vld [vmem:[%s1 + $0x98] sm:$0xff]
  %v44 = vld [vmem:[%s1 + $0xa0] sm:$0xff]
  %v45 = vld [vmem:[%s1 + $0xa8] sm:$0xff]
  %v46 = vld [vmem:[%s1 + $0xb0] sm:$0xff]
  %v47 = vld [vmem:[%s1 + $0xb8] sm:$0xff]
  %v48 = vld [vmem:[%s1 + $0xc0] sm:$0xff]
  %v49 = vld [vmem:[%s1 + $0xc8] sm:$0xff]
  %v50 = vld [vmem:[%s1 + $0xd0] sm:$0xff]
  %v51 = vld [vmem:[%s1 + $0xd8] sm:$0xff]
  %v52 = vld [vmem:[%s1 + $0xe0] sm:$0xff]
  %v53 = vld [vmem:[%s1 + $0xe8] sm:$0xff]
  %v54 = vld [vmem:[%s1 + $0xf0] sm:$0xff]
  %v55 = vld [vmem:[%s1 + $0xf8] sm:$0xff]
  %v56 = vld [vmem:[%s1 + $0x100] sm:$0xff]
  %v57 = vld [vmem:[%s1 + $0x108] sm:$0xff]
  %v58 = vld [vmem:[%s1 + $0x110] sm:$0xff]
  %v59 = vld [vmem:[%s1 + $0x118] sm:$0xff]
  %v60 = vld [vmem:[%s1 + $0x120] sm:$0xff]
  %v61 = vld [vmem:[%s1 + $0x128] sm:$0xff]
  %v62 = vld [vmem:[%s1 + $0x130] sm:$0xff]
  %v63 = vld [vmem:[%s1 + $0x138] sm:$0xff]
  %v64 = vld [vmem:[%s1 + $0x140] sm:$0xff]
  %v65 = vld [vmem:[%s1 + $0x148] sm:$0xff]
  %v66 = vld [vmem:[%s1 + $0x150] sm:$0xff]
  %v67 = vld [vmem:[%s1 + $0x158] sm:$0xff]
  %v68 = vld [vmem:[%s1 + $0x160] sm:$0xff]
  %v69 = vld [vmem:[%s1 + $0x168] sm:$0xff]
  %v70 = vld [vmem:[%s1 + $0x170] sm:$0xff]
  %v71 = vld [vmem:[%s1 + $0x178] sm:$0xff]
  %v72 = vld [vmem:[%s1 + $0x180] sm:$0xff]
  %v73 = vld [vmem:[%s1 + $0x188] sm:$0xff]
  %v74 = vld [vmem:[%s1 + $0x190] sm:$0xff]
  %v75 = vld [vmem:[%s1 + $0x198] sm:$0xff]
  %v76 = vld [vmem:[%s1 + $0x1a0] sm:$0xff]
  %v77 = vld [vmem:[%s1 + $0x1a8] sm:$0xff]
  %v78 = vld [vmem:[%s1 + $0x1b0] sm:$0xff]
  %v79 = vld [vmem:[%s1 + $0x1b8] sm:$0xff]
  %v80 = vld [vmem:[%s1 + $0x1c0] sm:$0xff]
  %v81 = vld [vmem:[%s1 + $0x1c8] sm:$0xff]
  %v82 = vld [vmem:[%s1 + $0x1d0] sm:$0xff]
  %v83 = vld [vmem:[%s1 + $0x1d8] sm:$0xff]
  %v84 = vld [vmem:[%s1 + $0x1e0] sm:$0xff]
  %v85 = vld [vmem:[%s1 + $0x1e8] sm:$0xff]
  %v86 = vld [vmem:[%s1 + $0x1f0] sm:$0xff]
  %v87 = vld [vmem:[%s1 + $0x1f8] sm:$0xff]
  %v88 = vld [vmem:[%s1 + $0x200] sm:$0xff]
  %v89 = vld [vmem:[%s1 + $0x208] sm:$0xff]
  %v90 = vld [vmem:[%s1 + $0x210] sm:$0xff]
  %v91 = vld [vmem:[%s1 + $0x218] sm:$0xff]
  %v92 = vld [vmem:[%s1 + $0x220] sm:$0xff]
  %v93 = vld [vmem:[%s1 + $0x228] sm:$0xff]
  %v94 = vld [vmem:[%s1 + $0x230] sm:$0xff]
  %v95 = vld [vmem:[%s1 + $0x238] sm:$0xff]
  %v96 = vld [vmem:[%s1 + $0x240] sm:$0xff]
  %v97 = vld [vmem:[%s1 + $0x248] sm:$0xff]
  %v98 = vld [vmem:[%s1 + $0x250] sm:$0xff]
  %v99 = vld [vmem:[%s1 + $0x258] sm:$0xff]
  %v100 = vld [vmem:[%s1 + $0x260] sm:$0xff]
  %v101 = vld [vmem:[%s1 + $0x268] sm:$0xff]
  %v102 = vld [vmem:[%s1 + $0x270] sm:$0xff]
  %v103 = vld [vmem:[%s1 + $0x278] sm:$0xff]
  %v104 = vld [vmem:[%s1 + $0x280] sm:$0xff]
  %v105 = vld [vmem:[%s1 + $0x288] sm:$0xff]
  %v106 = vld [vmem:[%s1 + $0x290] sm:$0xff]
  %v107 = vld [vmem:[%s1 + $0x298] sm:$0xff]
  %v108 = vld [vmem:[%s1 + $0x2a0] sm:$0xff]
  %v109 = vld [vmem:[%s1 + $0x2a8] sm:$0xff]
  %v110 = vld [vmem:[%s1 + $0x2b0] sm:$0xff]
  %v111 = vld [vmem:[%s1 + $0x2b8] sm:$0xff]
  %v112 = vld [vmem:[%s1 + $0x2c0] sm:$0xff]
  %v113 = vld [vmem:[%s1 + $0x2c8] sm:$0xff]
  %v114 = vld [vmem:[%s1 + $0x2d0] sm:$0xff]
  %v115 = vld [vmem:[%s1 + $0x2d8] sm:$0xff]
  %v116 = vld [vmem:[%s1 + $0x2e0] sm:$0xff]
  %v117 = vld [vmem:[%s1 + $0x2e8] sm:$0xff]
  %v118 = vld [vmem:[%s1 + $0x2f0] sm:$0xff]
  %v119 = vld [vmem:[%s1 + $0x2f8] sm:$0xff]
  %v120 = vld [vmem:[%s1 + $0x300] sm:$0xff]
  %v121 = vld [vmem:[%s1 + $0x308] sm:$0xff]
  %v122 = vld [vmem:[%s1 + $0x310] sm:$0xff]
  %v123 = vld [vmem:[%s1 + $0x318] sm:$0xff]
  %v124 = vld [vmem:[%s1 + $0x320] sm:$0xff]
  %v125 = vld [vmem:[%s1 + $0x328] sm:$0xff]
  %v126 = vld [vmem:[%s1 + $0x330] sm:$0xff]
  %v127 = vld [vmem:[%s1 + $0x338] sm:$0xff]
  %v128 = vld [vmem:[%s1 + $0x340] sm:$0xff]
  %v129 = vld [vmem:[%s1 + $0x348] sm:$0xff]
  %v130 = vld [vmem:[%s1 + $0x350] sm:$0xff]
  %v131 = vld [vmem:[%s1 + $0x358] sm:$0xff]
  %v132 = vld [vmem:[%s1 + $0x360] sm:$0xff]
  %v133 = vld [vmem:[%s1 + $0x368] sm:$0xff]
  %v134 = vld [vmem:[%s1 + $0x370] sm:$0xff]
  %v135 = vld [vmem:[%s1 + $0x378] sm:$0xff]
  %v136 = vld [vmem:[%s1 + $0x380] sm:$0xff]
  %v137 = vld [vmem:[%s1 + $0x388] sm:$0xff]
  %v138 = vld [vmem:[%s1 + $0x390] sm:$0xff]
  %v139 = vld [vmem:[%s1 + $0x398] sm:$0xff]
  %v140 = vld [vmem:[%s1 + $0x3a0] sm:$0xff]
  %v141 = vld [vmem:[%s1 + $0x3a8] sm:$0xff]
  %v142 = vld [vmem:[%s1 + $0x3b0] sm:$0xff]
  %v143 = vld [vmem:[%s1 + $0x3b8] sm:$0xff]
  %v144 = vld [vmem:[%s1 + $0x3c0] sm:$0xff]
  %v145 = vld [vmem:[%s1 + $0x3c8] sm:$0xff]
  %v146 = vld [vmem:[%s1 + $0x3d0] sm:$0xff]
  %v147 = vld [vmem:[%s1 + $0x3d8] sm:$0xff]
  %v148 = vld [vmem:[%s1 + $0x3e0] sm:$0xff]
  %v149 = vld [vmem:[%s1 + $0x3e8] sm:$0xff]
  %v150 = vld [vmem:[%s2] sm:$0x3]
  %v152 = vlaneseq
  %v153 = vshrl.u32 %v152, 7
  %v154 = vsub.s32 0, %v153
  %v155 = vrot.slane %v150, %v154
  %v156 = vlaneseq
  %v157 = vshrl.u32 %v156, 7
  %v158 = vsub.s32 1, %v157
  %v159 = vrot.slane %v150, %v158
  %vm162 = vcmask 982016
  %v164 = vsel %vm162, %v23, 0
  %166 = vmatprep.subr.mxu0 %v25
  %167 = vmatpush1.msra.mxu0 %v24
  %168 = vmatprep.subr.mxu0 %v27
  %169 = vmatpush1.msra.mxu0 %v26
  %170 = vmatprep.subr.mxu0 %v29
  %171 = vmatpush1.msra.mxu0 %v28
  %172 = vmatprep.subr.mxu0 %v31
  %173 = vmatpush1.msra.mxu0 %v30
  %174 = vmatprep.subr.mxu0 %v33
  %175 = vmatpush1.msra.mxu0 %v32
  %176 = vmatprep.subr.mxu0 %v35
  %177 = vmatpush1.msra.mxu0 %v34
  %178 = vmatprep.subr.mxu0 %v37
  %179 = vmatpush1.msra.mxu0 %v36
  %180 = vmatprep.subr.mxu0 %v39
  %181 = vmatpush1.msra.mxu0 %v38
  %182 = vmatprep.subr.mxu0 %v41
  %183 = vmatpush1.msra.mxu0 %v40
  %184 = vmatprep.subr.mxu0 %v43
  %185 = vmatpush1.msra.mxu0 %v42
  %186 = vmatprep.subr.mxu0 %v45
  %187 = vmatpush1.msra.mxu0 %v44
  %188 = vmatprep.subr.mxu0 %v47
  %189 = vmatpush1.msra.mxu0 %v46
  %190 = vmatprep.subr.mxu0 %v49
  %191 = vmatpush1.msra.mxu0 %v48
  %192 = vmatprep.subr.mxu0 %v51
  %193 = vmatpush1.msra.mxu0 %v50
  %194 = vmatprep.subr.mxu0 %v53
  %195 = vmatpush1.msra.mxu0 %v52
  %196 = vmatprep.subr.mxu0 %v55
  %197 = vmatpush1.msra.mxu0 %v54
  %198 = vmatprep.subr.mxu0 %v57
  %199 = vmatpush1.msra.mxu0 %v56
  %200 = vmatprep.subr.mxu0 %v59
  %201 = vmatpush1.msra.mxu0 %v58
  %202 = vmatprep.subr.mxu0 %v61
  %203 = vmatpush1.msra.mxu0 %v60
  %204 = vmatprep.subr.mxu0 %v63
  %205 = vmatpush1.msra.mxu0 %v62
  %206 = vmatprep.subr.mxu0 %v65
  %207 = vmatpush1.msra.mxu0 %v64
  %208 = vmatprep.subr.mxu0 %v67
  %209 = vmatpush1.msra.mxu0 %v66
  %210 = vmatprep.subr.mxu0 %v69
  %211 = vmatpush1.msra.mxu0 %v68
  %212 = vmatprep.subr.mxu0 %v71
  %213 = vmatpush1.msra.mxu0 %v70
  %214 = vmatprep.subr.mxu0 %v73
  %215 = vmatpush1.msra.mxu0 %v72
  %216 = vmatprep.subr.mxu0 %v75
  %217 = vmatpush1.msra.mxu0 %v74
  %218 = vmatprep.subr.mxu0 %v77
  %219 = vmatpush1.msra.mxu0 %v76
  %220 = vmatprep.subr.mxu0 %v79
  %221 = vmatpush1.msra.mxu0 %v78
  %222 = vmatprep.subr.mxu0 %v81
  %223 = vmatpush1.msra.mxu0 %v80
  %224 = vmatprep.subr.mxu0 %v83
  %225 = vmatpush1.msra.mxu0 %v82
  %226 = vmatprep.subr.mxu0 %v85
  %227 = vmatpush1.msra.mxu0 %v84
  %228 = vmatprep.subr.mxu0 %v87
  %229 = vmatpush1.msra.mxu0 %v86
  %230 = vmatprep.mubr.f32.mxu0 %v21
  %231 = vmatmul.mubr.f32.gmra.mrb[0].mxu0 %v20
  %v232 = vpop.f32.mrb[0].mxu0
  %v233 = vadd.f32 %v155, %v232
  %v234 = vpop.f32.mrb[0].mxu0
  %v235 = vadd.f32 %v159, %v234
  %236 = vdwg.mxu0
  %237 = vmatprep.subr.mxu0 %v89
  %238 = vmatpush1.msra.mxu0 %v88
  %239 = vmatprep.subr.mxu0 %v91
  %240 = vmatpush1.msra.mxu0 %v90
  %241 = vmatprep.subr.mxu0 %v93
  %242 = vmatpush1.msra.mxu0 %v92
  %243 = vmatprep.subr.mxu0 %v95
  %244 = vmatpush1.msra.mxu0 %v94
  %245 = vmatprep.subr.mxu0 %v97
  %246 = vmatpush1.msra.mxu0 %v96
  %247 = vmatprep.subr.mxu0 %v99
  %248 = vmatpush1.msra.mxu0 %v98
  %249 = vmatprep.subr.mxu0 %v101
  %250 = vmatpush1.msra.mxu0 %v100
  %251 = vmatprep.subr.mxu0 %v103
  %252 = vmatpush1.msra.mxu0 %v102
  %253 = vmatprep.subr.mxu0 %v105
  %254 = vmatpush1.msra.mxu0 %v104
  %255 = vmatprep.subr.mxu0 %v107
  %256 = vmatpush1.msra.mxu0 %v106
  %257 = vmatprep.subr.mxu0 %v109
  %258 = vmatpush1.msra.mxu0 %v108
  %259 = vmatprep.subr.mxu0 %v111
  %260 = vmatpush1.msra.mxu0 %v110
  %261 = vmatprep.subr.mxu0 %v113
  %262 = vmatpush1.msra.mxu0 %v112
  %263 = vmatprep.subr.mxu0 %v115
  %264 = vmatpush1.msra.mxu0 %v114
  %265 = vmatprep.subr.mxu0 %v117
  %266 = vmatpush1.msra.mxu0 %v116
  %267 = vmatprep.subr.mxu0 %v119
  %268 = vmatpush1.msra.mxu0 %v118
  %269 = vmatprep.subr.mxu0 %v121
  %270 = vmatpush1.msra.mxu0 %v120
  %271 = vmatprep.subr.mxu0 %v123
  %272 = vmatpush1.msra.mxu0 %v122
  %273 = vmatprep.subr.mxu0 %v125
  %274 = vmatpush1.msra.mxu0 %v124
  %275 = vmatprep.subr.mxu0 %v127
  %276 = vmatpush1.msra.mxu0 %v126
  %277 = vmatprep.subr.mxu0 %v129
  %278 = vmatpush1.msra.mxu0 %v128
  %279 = vmatprep.subr.mxu0 %v131
  %280 = vmatpush1.msra.mxu0 %v130
  %281 = vmatprep.subr.mxu0 %v133
  %282 = vmatpush1.msra.mxu0 %v132
  %283 = vmatprep.subr.mxu0 %v135
  %284 = vmatpush1.msra.mxu0 %v134
  %285 = vmatprep.subr.mxu0 %v137
  %286 = vmatpush1.msra.mxu0 %v136
  %287 = vmatprep.subr.mxu0 %v139
  %288 = vmatpush1.msra.mxu0 %v138
  %289 = vmatprep.subr.mxu0 %v141
  %290 = vmatpush1.msra.mxu0 %v140
  %291 = vmatprep.subr.mxu0 %v143
  %292 = vmatpush1.msra.mxu0 %v142
  %293 = vmatprep.subr.mxu0 %v145
  %294 = vmatpush1.msra.mxu0 %v144
  %295 = vmatprep.subr.mxu0 %v147
  %296 = vmatpush1.msra.mxu0 %v146
  %297 = vmatprep.subr.mxu0 %v149
  %298 = vmatpush1.msra.mxu0 %v148
  %299 = vmatprep.subr.mxu0 0.0
  %300 = vmatpush1.msra.mxu0 0.0
  %301 = vmatprep.mubr.f32.mxu0 %v164
  %302 = vmatmul.mubr.f32.gmra.mrb[0].mxu0 %v22
  %v303 = vpop.f32.mrb[0].mxu0
  %v304 = vadd.f32 %v233, %v303
  %v305 = vpop.f32.mrb[0].mxu0
  %v306 = vadd.f32 %v235, %v305
  %307 = vdwg.mxu0
  %v308 = vmax.f32 %v304, 0.0
  %v309 = vmax.f32 %v306, 0.0
  %v310 = vld [vmem:[%s3] sm:$0xff]
  %v311 = vld [vmem:[%s3 + $0x8] sm:$0xff]
  %v312 = vld [vmem:[%s3 + $0x10] sm:$0xff]
  %v313 = vld [vmem:[%s3 + $0x18] sm:$0xff]
  %v314 = vld [vmem:[%s3 + $0x20] sm:$0xff]
  %v315 = vld [vmem:[%s3 + $0x28] sm:$0xff]
  %v316 = vld [vmem:[%s3 + $0x30] sm:$0xff]
  %v317 = vld [vmem:[%s3 + $0x38] sm:$0xff]
  %v318 = vld [vmem:[%s3 + $0x40] sm:$0xff]
  %v319 = vld [vmem:[%s3 + $0x48] sm:$0xff]
  %v320 = vld [vmem:[%s3 + $0x50] sm:$0xff]
  %v321 = vld [vmem:[%s3 + $0x58] sm:$0xff]
  %v322 = vld [vmem:[%s3 + $0x60] sm:$0xff]
  %v323 = vld [vmem:[%s3 + $0x68] sm:$0xff]
  %v324 = vld [vmem:[%s3 + $0x70] sm:$0xff]
  %v325 = vld [vmem:[%s3 + $0x78] sm:$0xff]
  %v326 = vld [vmem:[%s3 + $0x80] sm:$0xff]
  %v327 = vld [vmem:[%s3 + $0x88] sm:$0xff]
  %v328 = vld [vmem:[%s3 + $0x90] sm:$0xff]
  %v329 = vld [vmem:[%s3 + $0x98] sm:$0xff]
  %v330 = vld [vmem:[%s3 + $0xa0] sm:$0xff]
  %v331 = vld [vmem:[%s3 + $0xa8] sm:$0xff]
  %v332 = vld [vmem:[%s3 + $0xb0] sm:$0xff]
  %v333 = vld [vmem:[%s3 + $0xb8] sm:$0xff]
  %v334 = vld [vmem:[%s3 + $0xc0] sm:$0xff]
  %v335 = vld [vmem:[%s3 + $0xc8] sm:$0xff]
  %v336 = vld [vmem:[%s3 + $0xd0] sm:$0xff]
  %v337 = vld [vmem:[%s3 + $0xd8] sm:$0xff]
  %v338 = vld [vmem:[%s3 + $0xe0] sm:$0xff]
  %v339 = vld [vmem:[%s3 + $0xe8] sm:$0xff]
  %v340 = vld [vmem:[%s3 + $0xf0] sm:$0xff]
  %v341 = vld [vmem:[%s3 + $0xf8] sm:$0xf]
  %v342 = vld [vmem:[%s4] sm:$0x1]
  %v344 = vlaneseq
  %v345 = vshrl.u32 %v344, 7
  %v346 = vsub.s32 0, %v345
  %v347 = vrot.slane %v342, %v346
  %vm349 = vcmask 1014784
  %v351 = vsel %vm349, %v309, 0
  %vm353 = vcmask 1043456
  %v355 = vsel %vm353, %v341, 0
  %357 = vmatprep.subr.mxu0 0.0
  %358 = vmatpush1.msra.mxu0 %v310
  %359 = vmatprep.subr.mxu0 0.0
  %360 = vmatpush1.msra.mxu0 %v311
  %361 = vmatprep.subr.mxu0 0.0
  %362 = vmatpush1.msra.mxu0 %v312
  %363 = vmatprep.subr.mxu0 0.0
  %364 = vmatpush1.msra.mxu0 %v313
  %365 = vmatprep.subr.mxu0 0.0
  %366 = vmatpush1.msra.mxu0 %v314
  %367 = vmatprep.subr.mxu0 0.0
  %368 = vmatpush1.msra.mxu0 %v315
  %369 = vmatprep.subr.mxu0 0.0
  %370 = vmatpush1.msra.mxu0 %v316
  %371 = vmatprep.subr.mxu0 0.0
  %372 = vmatpush1.msra.mxu0 %v317
  %373 = vmatprep.subr.mxu0 0.0
  %374 = vmatpush1.msra.mxu0 %v318
  %375 = vmatprep.subr.mxu0 0.0
  %376 = vmatpush1.msra.mxu0 %v319
  %377 = vmatprep.subr.mxu0 0.0
  %378 = vmatpush1.msra.mxu0 %v320
  %379 = vmatprep.subr.mxu0 0.0
  %380 = vmatpush1.msra.mxu0 %v321
  %381 = vmatprep.subr.mxu0 0.0
  %382 = vmatpush1.msra.mxu0 %v322
  %383 = vmatprep.subr.mxu0 0.0
  %384 = vmatpush1.msra.mxu0 %v323
  %385 = vmatprep.subr.mxu0 0.0
  %386 = vmatpush1.msra.mxu0 %v324
  %387 = vmatprep.subr.mxu0 0.0
  %388 = vmatpush1.msra.mxu0 %v325
  %389 = vmatprep.subr.mxu0 0.0
  %390 = vmatpush1.msra.mxu0 %v326
  %391 = vmatprep.subr.mxu0 0.0
  %392 = vmatpush1.msra.mxu0 %v327
  %393 = vmatprep.subr.mxu0 0.0
  %394 = vmatpush1.msra.mxu0 %v328
  %395 = vmatprep.subr.mxu0 0.0
  %396 = vmatpush1.msra.mxu0 %v329
  %397 = vmatprep.subr.mxu0 0.0
  %398 = vmatpush1.msra.mxu0 %v330
  %399 = vmatprep.subr.mxu0 0.0
  %400 = vmatpush1.msra.mxu0 %v331
  %401 = vmatprep.subr.mxu0 0.0
  %402 = vmatpush1.msra.mxu0 %v332
  %403 = vmatprep.subr.mxu0 0.0
  %404 = vmatpush1.msra.mxu0 %v333
  %405 = vmatprep.subr.mxu0 0.0
  %406 = vmatpush1.msra.mxu0 %v334
  %407 = vmatprep.subr.mxu0 0.0
  %408 = vmatpush1.msra.mxu0 %v335
  %409 = vmatprep.subr.mxu0 0.0
  %410 = vmatpush1.msra.mxu0 %v336
  %411 = vmatprep.subr.mxu0 0.0
  %412 = vmatpush1.msra.mxu0 %v337
  %413 = vmatprep.subr.mxu0 0.0
  %414 = vmatpush1.msra.mxu0 %v338
  %415 = vmatprep.subr.mxu0 0.0
  %416 = vmatpush1.msra.mxu0 %v339
  %417 = vmatprep.subr.mxu0 0.0
  %418 = vmatpush1.msra.mxu0 %v340
  %419 = vmatprep.subr.mxu0 0.0
  %420 = vmatpush1.msra.mxu0 %v355
  %421 = vmatprep.mubr.f32.mxu0 %v351
  %422 = vmatmul.mubr.f32.gmra.mrb[0].mxu0 %v308
  %v423 = vpop.f32.mrb[0].mxu0
  %v424 = vadd.f32 %v347, %v423
  %v425 = vpop.f32.mrb[0].mxu0
  %426 = vdwg.mxu0
  %vm427 = vcmask 291840
  %428 = vst.msk [vmem:[%s5] sm:$0x3f] %vm427, %v424
  // Predicated region
  $region22: #{feedforward.1} parent=0 // pred_check
    _
  $region23: #{feedforward.1} parent=0 // pred_check_branch
    %430 = sbr.rel (0) target = $region25
  $region24: #{feedforward.1} parent=0 // pred_region
    _
  $region25: #{feedforward.1} parent=0 // pred_fallthru
    _
  // Predicated region
  $region26: #{feedforward.1} parent=0 // pred_check
    _
  $region27: #{feedforward.1} parent=0 // pred_check_branch
    %432 = sbr.rel (0) target = $region29
  $region28: #{feedforward.1} parent=0 // pred_region
    _
  $region29: #{feedforward.1} parent=0 // pred_fallthru
    _

</llo_original>
